<compile_context>
chip_gen: v5e
topology: v5e:2x2
jax: 0.10.0
libtpu: 0.0.40
codegen_flags: <defaults>
</compile_context>

<pallas_src>
import functools

import jax
import jax.numpy as jnp
from jax.experimental import pallas as pl
from jax.experimental.pallas import tpu as pltpu

LANE = 128


def _round_up(n, m):
    return ((n + m - 1) // m) * m


def _cdiv(a, b):
    return (a + b - 1) // b


def _pad2(a, rows, cols):
    r, c = a.shape
    return jnp.pad(a, ((0, rows - r), (0, cols - c)))


def qnet_kernel(x_ref, w1_ref, b1_ref, w2_ref, b2_ref, w3_ref, b3_ref, o_ref):
    obs_dim = x_ref.shape[-1]
    if obs_dim <= 16:
        # Tiny contraction dim: unrolled VPU FMAs (avoids a degenerate K<8 MXU
        # matmul and any narrow-K lowering edge cases). Inputs are rounded
        # through bf16 so the math matches the MXU path / reference numerics.
        xq = x_ref[...].astype(jnp.bfloat16).astype(jnp.float32)
        w1 = w1_ref[...].astype(jnp.float32)
        h1 = jnp.zeros((xq.shape[0], w1.shape[1]), jnp.float32)
        for k in range(obs_dim):
            h1 = h1 + xq[:, k:k + 1] * w1[k:k + 1, :]
    else:
        # General path: bf16 MXU matmul, f32 accumulate.
        h1 = jnp.dot(x_ref[...].astype(jnp.bfloat16), w1_ref[...],
                     preferred_element_type=jnp.float32)
    h1 = jnp.maximum(h1 + b1_ref[...], 0.0)

    # fc2 + ReLU (bf16 MXU matmul, f32 accumulate, f32 VPU bias/ReLU)
    h2 = jnp.dot(h1.astype(jnp.bfloat16), w2_ref[...],
                 preferred_element_type=jnp.float32)
    h2 = jnp.maximum(h2 + b2_ref[...], 0.0)

    # fc3: lane-padded matmul in VMEM; store only the real action logits
    # (narrow masked store -> 8 B/row of HBM write instead of 512 B/row).
    h3 = jnp.dot(h2.astype(jnp.bfloat16), w3_ref[...],
                 preferred_element_type=jnp.float32)
    na = o_ref.shape[-1]
    o_ref[...] = (h3[:, :na] + b3_ref[...]).astype(o_ref.dtype)


def prepare_params(w1, b1, w2, b2, w3, b3):
    """One-time padding / bf16 casting of the weights (hoisted out of the forward)."""
    obs_dim, h1_dim = w1.shape
    h2_dim = w2.shape[1]
    n_actions = w3.shape[1]
    h1p = _round_up(h1_dim, LANE)      # 144 -> 256
    h2p = _round_up(h2_dim, LANE)      # 36  -> 128
    ap = _round_up(n_actions, LANE)    # internal only; padded logits never leave VMEM
    w1p = _pad2(w1.astype(jnp.bfloat16), obs_dim, h1p)
    w2p = _pad2(w2.astype(jnp.bfloat16), h1p, h2p)
    w3p = _pad2(w3.astype(jnp.bfloat16), h2p, ap)
    b1p = _pad2(b1.astype(jnp.float32), 1, h1p)
    b2p = _pad2(b2.astype(jnp.float32), 1, h2p)
    b3p = b3.astype(jnp.float32)       # kept unpadded: its width defines the output
    return w1p, b1p, w2p, b2p, w3p, b3p


@functools.partial(jax.jit, static_argnames=("block_batch",))
def qnetwork_forward(x, w1p, b1p, w2p, b2p, w3p, b3p, *, block_batch=512):
    """x: [B, obs_dim] f32; padded params from prepare_params(). Returns [B, n_actions] f32."""
    batch, obs_dim = x.shape
    h1p = w1p.shape[1]
    h2p = w2p.shape[1]
    ap = w3p.shape[1]
    n_actions = b3p.shape[1]

    # Batch tile: multiple of 8, aim for >= 2 grid steps (v7x 2-TC sharding)
    # while keeping ragged-batch padding waste small.
    b8 = _round_up(batch, 8)
    n_tiles = max(2, _cdiv(b8, block_batch))
    tb = min(block_batch, _round_up(_cdiv(b8, n_tiles), 8))
    bp = _round_up(b8, tb)

    xp = x.astype(jnp.float32)
    if bp != batch:
        xp = jnp.pad(xp, ((0, bp - batch), (0, 0)))  # zero rows: math unchanged

    const = lambda i: (0, 0)
    cost = pl.CostEstimate(
        flops=2 * bp * (obs_dim * h1p + h1p * h2p + h2p * ap),
        transcendentals=0,
        bytes_accessed=(bp * obs_dim * 4                            # x (streamed)
                        + (w1p.size + w2p.size + w3p.size) * 2      # bf16 weights (stationary)
                        + (b1p.size + b2p.size + b3p.size) * 4      # f32 biases
                        + bp * n_actions * 4),                      # logits
    )

    out = pl.pallas_call(
        qnet_kernel,
        out_shape=jax.ShapeDtypeStruct((bp, n_actions), jnp.float32),
        grid=(bp // tb,),
        in_specs=[
            pl.BlockSpec((tb, obs_dim), lambda i: (i, 0)),   # x: streamed, unpadded lanes
            pl.BlockSpec((obs_dim, h1p), const),             # weights/biases: stationary
            pl.BlockSpec((1, h1p), const),
            pl.BlockSpec((h1p, h2p), const),
            pl.BlockSpec((1, h2p), const),
            pl.BlockSpec((h2p, ap), const),
            pl.BlockSpec((1, n_actions), const),
        ],
        out_specs=pl.BlockSpec((tb, n_actions), lambda i: (i, 0)),  # unpadded logits
        compiler_params=pltpu.CompilerParams(
            dimension_semantics=("parallel",),   # batch axis shards across v7x's 2 TCs
        ),
        cost_estimate=cost,
    )(xp, w1p, b1p, w2p, b2p, w3p, b3p)

    return out if bp == batch else out[:batch]


def init_params(key, obs_dim, n_actions):
    """nn.Linear-style init (uniform +/- 1/sqrt(fan_in)); weights stored [in, out]."""
    dims = [(obs_dim, 144), (144, 36), (36, n_actions)]
    params = []
    for fan_in, fan_out in dims:
        key, kw, kb = jax.random.split(key, 3)
        bound = 1.0 / jnp.sqrt(fan_in)
        w = jax.random.uniform(kw, (fan_in, fan_out), jnp.float32, -bound, bound)
        b = jax.random.uniform(kb, (1, fan_out), jnp.float32, -bound, bound)
        params += [w, b]
    return params


def reference_forward(x, w1, b1, w2, b2, w3, b3, matmul_dtype=jnp.bfloat16):
    """Reference: matmul inputs in `matmul_dtype`, f32 accumulate / bias / ReLU."""
    def dense(a, w, b):
        y = jnp.dot(a.astype(matmul_dtype), w.astype(matmul_dtype),
                    preferred_element_type=jnp.float32)
        return y + b
    h1 = jnp.maximum(dense(x, w1, b1), 0.0)
    h2 = jnp.maximum(dense(h1, w2, b2), 0.0)
    return dense(h2, w3, b3)


if __name__ == "__main__":
    key = jax.random.PRNGKey(0)
    batch, obs_dim, n_actions = 8, 4, 2  # CartPole-like env

    key, kx = jax.random.split(key)
    x = jax.random.normal(kx, (batch, obs_dim), dtype=jnp.float32)
    raw = init_params(key, obs_dim, n_actions)
    w1, b1, w2, b2, w3, b3 = raw

    padded = prepare_params(*raw)          # one-time, reused every forward call
    out = qnetwork_forward(x, *padded)
    out = jax.block_until_ready(out)
    assert out.shape == (batch, n_actions)

    # Check vs a reference using the same bf16-matmul / f32-accumulate numerics
    # (loose enough to tolerate bf16 rounding-boundary flips of intermediates).
    ref = reference_forward(x, *raw)
    assert jnp.allclose(out, ref, atol=1e-2, rtol=1e-2), float(jnp.max(jnp.abs(out - ref)))

    # Sanity check vs the pure-f32 PyTorch-equivalent forward (bf16 rounding only).
    ref_f32 = reference_forward(x, *raw, matmul_dtype=jnp.float32)
    assert jnp.allclose(out, ref_f32, atol=5e-2, rtol=5e-2), float(jnp.max(jnp.abs(out - ref_f32)))

    print("KERNEL_OK")
</pallas_src>

<mosaic_0001>
module attributes {stable_mosaic.version = 11 : i64} {
  func.func @qnet_kernel(%arg0: i32, %arg1: memref<8x4xf32, #tpu.memory_space<vmem>>, %arg2: memref<4x256xbf16, #tpu.memory_space<vmem>>, %arg3: memref<1x256xf32, #tpu.memory_space<vmem>>, %arg4: memref<256x128xbf16, #tpu.memory_space<vmem>>, %arg5: memref<1x128xf32, #tpu.memory_space<vmem>>, %arg6: memref<128x128xbf16, #tpu.memory_space<vmem>>, %arg7: memref<1x2xf32, #tpu.memory_space<vmem>>, %arg8: memref<8x2xf32, #tpu.memory_space<vmem>>) attributes {dimension_semantics = [#tpu.dimension_semantics<parallel>], iteration_bounds = array<i64: 1>, scalar_prefetch = 0 : i64, scratch_operands = 0 : i64, tpu.core_type = #tpu.core_type<tc>, window_params = [{transform_indices = @transform_0, window_bounds = array<i64: 8, 4>}, {pipeline_mode = #tpu.pipeline_mode<synchronous>, transform_indices = @transform_1, window_bounds = array<i64: 4, 256>}, {pipeline_mode = #tpu.pipeline_mode<synchronous>, transform_indices = @transform_2, window_bounds = array<i64: 1, 256>}, {pipeline_mode = #tpu.pipeline_mode<synchronous>, transform_indices = @transform_3, window_bounds = array<i64: 256, 128>}, {pipeline_mode = #tpu.pipeline_mode<synchronous>, transform_indices = @transform_4, window_bounds = array<i64: 1, 128>}, {pipeline_mode = #tpu.pipeline_mode<synchronous>, transform_indices = @transform_5, window_bounds = array<i64: 128, 128>}, {pipeline_mode = #tpu.pipeline_mode<synchronous>, transform_indices = @transform_6, window_bounds = array<i64: 1, 2>}, {transform_indices = @transform_7, window_bounds = array<i64: 8, 2>}]} {
    %c0 = arith.constant 0 : index
    %c0_0 = arith.constant 0 : index
    %0 = vector.load %arg1[%c0, %c0_0] : memref<8x4xf32, #tpu.memory_space<vmem>>, vector<8x4xf32>
    %1 = arith.truncf %0 : vector<8x4xf32> to vector<8x4xbf16>
    %2 = arith.extf %1 : vector<8x4xbf16> to vector<8x4xf32>
    %c0_1 = arith.constant 0 : index
    %c0_2 = arith.constant 0 : index
    %3 = vector.load %arg2[%c0_1, %c0_2] : memref<4x256xbf16, #tpu.memory_space<vmem>>, vector<4x256xbf16>
    %4 = arith.extf %3 : vector<4x256xbf16> to vector<4x256xf32>
    %cst = arith.constant 0.000000e+00 : f32
    %5 = vector.broadcast %cst : f32 to vector<8x256xf32>
    %6 = vector.extract_strided_slice %2 {offsets = [0, 0], sizes = [8, 1], strides = [1, 1]} : vector<8x4xf32> to vector<8x1xf32>
    %7 = vector.extract_strided_slice %4 {offsets = [0, 0], sizes = [1, 256], strides = [1, 1]} : vector<4x256xf32> to vector<1x256xf32>
    %8 = vector.broadcast %6 : vector<8x1xf32> to vector<8x256xf32>
    %9 = vector.broadcast %7 : vector<1x256xf32> to vector<8x256xf32>
    %10 = arith.mulf %8, %9 : vector<8x256xf32>
    %11 = arith.addf %5, %10 : vector<8x256xf32>
    %12 = vector.extract_strided_slice %2 {offsets = [0, 1], sizes = [8, 1], strides = [1, 1]} : vector<8x4xf32> to vector<8x1xf32>
    %13 = vector.extract_strided_slice %4 {offsets = [1, 0], sizes = [1, 256], strides = [1, 1]} : vector<4x256xf32> to vector<1x256xf32>
    %14 = vector.broadcast %12 : vector<8x1xf32> to vector<8x256xf32>
    %15 = vector.broadcast %13 : vector<1x256xf32> to vector<8x256xf32>
    %16 = arith.mulf %14, %15 : vector<8x256xf32>
    %17 = arith.addf %11, %16 : vector<8x256xf32>
    %18 = vector.extract_strided_slice %2 {offsets = [0, 2], sizes = [8, 1], strides = [1, 1]} : vector<8x4xf32> to vector<8x1xf32>
    %19 = vector.extract_strided_slice %4 {offsets = [2, 0], sizes = [1, 256], strides = [1, 1]} : vector<4x256xf32> to vector<1x256xf32>
    %20 = vector.broadcast %18 : vector<8x1xf32> to vector<8x256xf32>
    %21 = vector.broadcast %19 : vector<1x256xf32> to vector<8x256xf32>
    %22 = arith.mulf %20, %21 : vector<8x256xf32>
    %23 = arith.addf %17, %22 : vector<8x256xf32>
    %24 = vector.extract_strided_slice %2 {offsets = [0, 3], sizes = [8, 1], strides = [1, 1]} : vector<8x4xf32> to vector<8x1xf32>
    %25 = vector.extract_strided_slice %4 {offsets = [3, 0], sizes = [1, 256], strides = [1, 1]} : vector<4x256xf32> to vector<1x256xf32>
    %26 = vector.broadcast %24 : vector<8x1xf32> to vector<8x256xf32>
    %27 = vector.broadcast %25 : vector<1x256xf32> to vector<8x256xf32>
    %28 = arith.mulf %26, %27 : vector<8x256xf32>
    %29 = arith.addf %23, %28 : vector<8x256xf32>
    %c0_3 = arith.constant 0 : index
    %c0_4 = arith.constant 0 : index
    %30 = vector.load %arg3[%c0_3, %c0_4] : memref<1x256xf32, #tpu.memory_space<vmem>>, vector<1x256xf32>
    %31 = vector.broadcast %30 : vector<1x256xf32> to vector<8x256xf32>
    %32 = arith.addf %29, %31 : vector<8x256xf32>
    %cst_5 = arith.constant 0.000000e+00 : f32
    %33 = vector.broadcast %cst_5 : f32 to vector<8x256xf32>
    %34 = arith.maximumf %32, %33 : vector<8x256xf32>
    %35 = arith.truncf %34 : vector<8x256xf32> to vector<8x256xbf16>
    %c0_6 = arith.constant 0 : index
    %c0_7 = arith.constant 0 : index
    %36 = vector.load %arg4[%c0_6, %c0_7] : memref<256x128xbf16, #tpu.memory_space<vmem>>, vector<256x128xbf16>
    %cst_8 = arith.constant dense<0.000000e+00> : vector<8x128xf32>
    %37 = tpu.matmul %35, %36, %cst_8 {dimension_numbers = #tpu.dot_dimension_numbers<[1], [0], [0], [1], [0, 0, 1, 1], [], []>} : vector<8x256xbf16>, vector<256x128xbf16>, vector<8x128xf32> -> vector<8x128xf32>
    %c0_9 = arith.constant 0 : index
    %c0_10 = arith.constant 0 : index
    %38 = vector.load %arg5[%c0_9, %c0_10] : memref<1x128xf32, #tpu.memory_space<vmem>>, vector<1x128xf32>
    %39 = vector.broadcast %38 : vector<1x128xf32> to vector<8x128xf32>
    %40 = arith.addf %37, %39 : vector<8x128xf32>
    %cst_11 = arith.constant 0.000000e+00 : f32
    %41 = vector.broadcast %cst_11 : f32 to vector<8x128xf32>
    %42 = arith.maximumf %40, %41 : vector<8x128xf32>
    %43 = arith.truncf %42 : vector<8x128xf32> to vector<8x128xbf16>
    %c0_12 = arith.constant 0 : index
    %c0_13 = arith.constant 0 : index
    %44 = vector.load %arg6[%c0_12, %c0_13] : memref<128x128xbf16, #tpu.memory_space<vmem>>, vector<128x128xbf16>
    %cst_14 = arith.constant dense<0.000000e+00> : vector<8x128xf32>
    %45 = tpu.matmul %43, %44, %cst_14 {dimension_numbers = #tpu.dot_dimension_numbers<[1], [0], [0], [1], [0, 0, 1, 1], [], []>} : vector<8x128xbf16>, vector<128x128xbf16>, vector<8x128xf32> -> vector<8x128xf32>
    %46 = vector.extract_strided_slice %45 {offsets = [0, 0], sizes = [8, 2], strides = [1, 1]} : vector<8x128xf32> to vector<8x2xf32>
    %c0_15 = arith.constant 0 : index
    %c0_16 = arith.constant 0 : index
    %47 = vector.load %arg7[%c0_15, %c0_16] : memref<1x2xf32, #tpu.memory_space<vmem>>, vector<1x2xf32>
    %48 = vector.broadcast %47 : vector<1x2xf32> to vector<8x2xf32>
    %49 = arith.addf %46, %48 : vector<8x2xf32>
    %c0_17 = arith.constant 0 : index
    %c0_18 = arith.constant 0 : index
    %50 = vector.load %arg8[%c0_17, %c0_18] : memref<8x2xf32, #tpu.memory_space<vmem>>, vector<8x2xf32>
    tpu.vector_store %arg8[%c0_17, %c0_18], %49 {strides = array<i32>} : memref<8x2xf32, #tpu.memory_space<vmem>>, vector<8x2xf32>,
    return
  }
  func.func @transform_0(%arg0: i32) -> (i32, i32) {
    %c0_i32 = arith.constant 0 : i32
    %c0_i32_0 = arith.constant 0 : i32
    return %arg0, %c0_i32 : i32, i32
  }
  func.func @transform_1(%arg0: i32) -> (i32, i32) {
    %c0_i32 = arith.constant 0 : i32
    %c0_i32_0 = arith.constant 0 : i32
    %c0_i32_1 = arith.constant 0 : i32
    return %c0_i32, %c0_i32_0 : i32, i32
  }
  func.func @transform_2(%arg0: i32) -> (i32, i32) {
    %c0_i32 = arith.constant 0 : i32
    %c0_i32_0 = arith.constant 0 : i32
    %c0_i32_1 = arith.constant 0 : i32
    return %c0_i32, %c0_i32_0 : i32, i32
  }
  func.func @transform_3(%arg0: i32) -> (i32, i32) {
    %c0_i32 = arith.constant 0 : i32
    %c0_i32_0 = arith.constant 0 : i32
    %c0_i32_1 = arith.constant 0 : i32
    return %c0_i32, %c0_i32_0 : i32, i32
  }
  func.func @transform_4(%arg0: i32) -> (i32, i32) {
    %c0_i32 = arith.constant 0 : i32
    %c0_i32_0 = arith.constant 0 : i32
    %c0_i32_1 = arith.constant 0 : i32
    return %c0_i32, %c0_i32_0 : i32, i32
  }
  func.func @transform_5(%arg0: i32) -> (i32, i32) {
    %c0_i32 = arith.constant 0 : i32
    %c0_i32_0 = arith.constant 0 : i32
    %c0_i32_1 = arith.constant 0 : i32
    return %c0_i32, %c0_i32_0 : i32, i32
  }
  func.func @transform_6(%arg0: i32) -> (i32, i32) {
    %c0_i32 = arith.constant 0 : i32
    %c0_i32_0 = arith.constant 0 : i32
    %c0_i32_1 = arith.constant 0 : i32
    return %c0_i32, %c0_i32_0 : i32, i32
  }
  func.func @transform_7(%arg0: i32) -> (i32, i32) {
    %c0_i32 = arith.constant 0 : i32
    %c0_i32_0 = arith.constant 0 : i32
    return %arg0, %c0_i32 : i32, i32
  }
}

</mosaic_0001>

<llo_original>
// kernel: qnetwork_forward.1
$region0: #{qnetwork_forward.1}
  #allocation0 [shape = 'u32[]', space=smem, size = 0x4, offset = 0x4, fixed_abs, tag = 'smem constant byte address 0x4 - core index']
  #allocation1 [shape = 'u32[72,128]{1,0:T(1,128)}', space=vmem, size = 0x9000, scoped, tag = 'internal scratch']
  %s0 = inlined_call_operand.vmem [shape: f32[8,4], index: 0, kind: input, shape index: {}]
  %s1 = inlined_call_operand.vmem [shape: bf16[4,256], index: 1, kind: input, shape index: {}]
  %s2 = inlined_call_operand.vmem [shape: f32[1,256], index: 2, kind: input, shape index: {}]
  %s3 = inlined_call_operand.hbm [shape: bf16[256,128], index: 3, kind: input, shape index: {}]
  %s4 = inlined_call_operand.vmem [shape: f32[1,128], index: 4, kind: input, shape index: {}]
  %s5 = inlined_call_operand.hbm [shape: bf16[128,128], index: 5, kind: input, shape index: {}]
  %s6 = inlined_call_operand.vmem [shape: f32[1,2], index: 6, kind: input, shape index: {}]
  %s7 = inlined_call_operand.vmem [shape: f32[8,2], index: 7, kind: output, shape index: {}]
  %s8 = sld [smem:[#allocation0]]
  $region46: #{qnetwork_forward.1} parent=0
    _
  %s10 = ssub.s32 1, %s8
  %s11 = scalar_select 0, %s10, %s8
  $region1: #{qnetwork_forward.1} parent=0
    #allocation2 [shape = 'u8[65536]{0}', space=vmem, size = 0x10000, scoped, tag = 'input window, operand 3, single buffered']
    #allocation3 [shape = 's32[1]{0}', space=sflag, size = 0x4, scoped, tag = 'scoped memory for qnetwork_forward.1']
    #allocation4 [shape = 'u8[32768]{0}', space=vmem, size = 0x8000, scoped, tag = 'input window, operand 5, single buffered']
    #allocation5 [shape = 's32[1]{0}', space=sflag, size = 0x4, scoped, tag = 'scoped memory for qnetwork_forward.1']
    %12 = vsyncpa [#allocation3], 0
    %13 = vsyncpa [#allocation5], 0
    // Predicated region
    $region2: #{qnetwork_forward.1} parent=1 // pred_check
      _
    $region3: #{qnetwork_forward.1} parent=1 // pred_check_branch
      %15 = sbr.rel (0) target = $region5
    $region4: #{qnetwork_forward.1} parent=1 // pred_region
      _
    $region5: #{qnetwork_forward.1} parent=1 // pred_fallthru
      _
    // Predicated region
    $region6: #{qnetwork_forward.1} parent=1 // pred_check
      _
    $region7: #{qnetwork_forward.1} parent=1 // pred_check_branch
      %17 = sbr.rel (0) target = $region9
    $region8: #{qnetwork_forward.1} parent=1 // pred_region
      _
    $region9: #{qnetwork_forward.1} parent=1 // pred_fallthru
      _
    // Predicated region
    $region10: #{qnetwork_forward.1} parent=1 // pred_check
      _
    $region11: #{qnetwork_forward.1} parent=1 // pred_check_branch
      %19 = sbr.rel (0) target = $region13
    $region12: #{qnetwork_forward.1} parent=1 // pred_region
      _
    $region13: #{qnetwork_forward.1} parent=1 // pred_fallthru
      _
    // Predicated region
    $region14: #{qnetwork_forward.1} parent=1 // pred_check
      _
    $region15: #{qnetwork_forward.1} parent=1 // pred_check_branch
      %21 = sbr.rel (0) target = $region17
    $region16: #{qnetwork_forward.1} parent=1 // pred_region
      %23 = vsyncadd [#allocation3], 0
      %s24 = sshll.u32 %s3, 4
      %s25 = int_to_ptr.hbm [resolvable:$true] %s24
      %s26 = sshll.u32 [#allocation2], 4
      %s27 = int_to_ptr.vmem [resolvable:$true] %s26
      %32 = dma.hbm_to_vmem [thread:$0]  %s25, 2048, %s27, [#allocation3], 64, 64, 4
    $region17: #{qnetwork_forward.1} parent=1 // pred_fallthru
      _
    // Predicated region
    $region18: #{qnetwork_forward.1} parent=1 // pred_check
      _
    $region19: #{qnetwork_forward.1} parent=1 // pred_check_branch
      %34 = sbr.rel (0) target = $region21
    $region20: #{qnetwork_forward.1} parent=1 // pred_region
      _
    $region21: #{qnetwork_forward.1} parent=1 // pred_fallthru
      _
    // Predicated region
    $region22: #{qnetwork_forward.1} parent=1 // pred_check
      _
    $region23: #{qnetwork_forward.1} parent=1 // pred_check_branch
      %36 = sbr.rel (0) target = $region25
    $region24: #{qnetwork_forward.1} parent=1 // pred_region
      %38 = vsyncadd [#allocation5], 0
      %s39 = sshll.u32 %s5, 4
      %s40 = int_to_ptr.hbm [resolvable:$true] %s39
      %s41 = sshll.u32 [#allocation4], 4
      %s42 = int_to_ptr.vmem [resolvable:$true] %s41
      %47 = dma.hbm_to_vmem [thread:$0]  %s40, 1024, %s42, [#allocation5], 64, 64, 4
    $region25: #{qnetwork_forward.1} parent=1 // pred_fallthru
      _
    // Predicated region
    $region26: #{qnetwork_forward.1} parent=1 // pred_check
      _
    $region27: #{qnetwork_forward.1} parent=1 // pred_check_branch
      %49 = sbr.rel (0) target = $region29
    $region28: #{qnetwork_forward.1} parent=1 // pred_region
      _
    $region29: #{qnetwork_forward.1} parent=1 // pred_fallthru
      _
    // Predicated region
    $region30: #{qnetwork_forward.1} parent=1 // pred_check
      _
    $region31: #{qnetwork_forward.1} parent=1 // pred_check_branch
      %51 = sbr.rel (0) target = $region33
    $region32: #{qnetwork_forward.1} parent=1 // pred_region
      %53 = dma.done [#allocation3], 2048
    $region33: #{qnetwork_forward.1} parent=1 // pred_fallthru
      _
    // Predicated region
    $region34: #{qnetwork_forward.1} parent=1 // pred_check
      _
    $region35: #{qnetwork_forward.1} parent=1 // pred_check_branch
      %55 = sbr.rel (0) target = $region37
    $region36: #{qnetwork_forward.1} parent=1 // pred_region
      %57 = dma.done [#allocation5], 1024
    $region37: #{qnetwork_forward.1} parent=1 // pred_fallthru
      _
    %v58 = vld [vmem:[%s0] sm:$0xff]
    %v59 = vpack.c.bf16 %v58, %v58
    %v60 = vunpack.c.l.bf16 %v59
    %v61 = vld [vmem:[%s1] sm:$0xf]
    %v62 = vunpack.c.l.bf16 %v61
    %64 = vset.pattern.permute.xlu0 0
    %65 = vperm.xlu0 %64, %v60
    %v66 = vpop.permute.xlu0 %65
    %v69 = vperm.slane %v62, 0
    %v70 = vperm.slane %v62, 4
    %v73 = vperm.slane %v69, 0
    %v74 = vperm.slane %v70, 0
    %v75 = vmul.f32 %v66, %v73
    %v76 = vmul.f32 %v66, %v74
    %v77 = vadd.f32 %v75, 0.0
    %v78 = vadd.f32 %v76, 0.0
    %79 = vset.pattern.permute.xlu0 1
    %80 = vperm.xlu0 %79, %v60
    %v81 = vpop.permute.xlu0 %80
    %v83 = vperm.slane %v62, 1
    %v84 = vperm.slane %v62, 5
    %v87 = vperm.slane %v83, 1
    %v88 = vperm.slane %v84, 1
    %v89 = vmul.f32 %v81, %v87
    %v90 = vmul.f32 %v81, %v88
    %v91 = vadd.f32 %v77, %v89
    %v92 = vadd.f32 %v78, %v90
    %93 = vset.pattern.permute.xlu0 2
    %94 = vperm.xlu0 %93, %v60
    %v95 = vpop.permute.xlu0 %94
    %v97 = vperm.slane %v62, 2
    %v98 = vperm.slane %v62, 6
    %v101 = vperm.slane %v97, 2
    %v102 = vperm.slane %v98, 2
    %v103 = vmul.f32 %v95, %v101
    %v104 = vmul.f32 %v95, %v102
    %v105 = vadd.f32 %v91, %v103
    %v106 = vadd.f32 %v92, %v104
    %107 = vset.pattern.permute.xlu0 3
    %108 = vperm.xlu0 %107, %v60
    %v109 = vpop.permute.xlu0 %108
    %v111 = vperm.slane %v62, 3
    %v112 = vperm.slane %v62, 7
    %v115 = vperm.slane %v111, 3
    %v116 = vperm.slane %v112, 3
    %v117 = vmul.f32 %v109, %v115
    %v118 = vmul.f32 %v109, %v116
    %v119 = vadd.f32 %v105, %v117
    %v120 = vadd.f32 %v106, %v118
    %v121 = vld [vmem:[%s2] sm:$0x3]
    %v123 = vperm.slane %v121, 0
    %v124 = vperm.slane %v121, 1
    %v127 = vadd.f32 %v119, %v123
    %v128 = vadd.f32 %v120, %v124
    %v129 = vmax.f32 %v127, 0.0
    %v130 = vmax.f32 %v128, 0.0
    %v131 = vpack.c.bf16 %v129, %v129
    %v132 = vpack.c.bf16 %v130, %v130
    %v133 = vld [vmem:[#allocation2] sm:$0xf]
    %v134 = vld [vmem:[#allocation2 + $0x4] sm:$0xf]
    %v135 = vld [vmem:[#allocation2 + $0x8] sm:$0xf]
    %v136 = vld [vmem:[#allocation2 + $0xc] sm:$0xf]
    %v137 = vld [vmem:[#allocation2 + $0x10] sm:$0xf]
    %v138 = vld [vmem:[#allocation2 + $0x14] sm:$0xf]
    %v139 = vld [vmem:[#allocation2 + $0x18] sm:$0xf]
    %v140 = vld [vmem:[#allocation2 + $0x1c] sm:$0xf]
    %v141 = vld [vmem:[#allocation2 + $0x20] sm:$0xf]
    %v142 = vld [vmem:[#allocation2 + $0x24] sm:$0xf]
    %v143 = vld [vmem:[#allocation2 + $0x28] sm:$0xf]
    %v144 = vld [vmem:[#allocation2 + $0x2c] sm:$0xf]
    %v145 = vld [vmem:[#allocation2 + $0x30] sm:$0xf]
    %v146 = vld [vmem:[#allocation2 + $0x34] sm:$0xf]
    %v147 = vld [vmem:[#allocation2 + $0x38] sm:$0xf]
    %v148 = vld [vmem:[#allocation2 + $0x3c] sm:$0xf]
    %v149 = vld [vmem:[#allocation2 + $0x40] sm:$0xf]
    %v150 = vld [vmem:[#allocation2 + $0x44] sm:$0xf]
    %v151 = vld [vmem:[#allocation2 + $0x48] sm:$0xf]
    %v152 = vld [vmem:[#allocation2 + $0x4c] sm:$0xf]
    %v153 = vld [vmem:[#allocation2 + $0x50] sm:$0xf]
    %v154 = vld [vmem:[#allocation2 + $0x54] sm:$0xf]
    %v155 = vld [vmem:[#allocation2 + $0x58] sm:$0xf]
    %v156 = vld [vmem:[#allocation2 + $0x5c] sm:$0xf]
    %v157 = vld [vmem:[#allocation2 + $0x60] sm:$0xf]
    %v158 = vld [vmem:[#allocation2 + $0x64] sm:$0xf]
    %v159 = vld [vmem:[#allocation2 + $0x68] sm:$0xf]
    %v160 = vld [vmem:[#allocation2 + $0x6c] sm:$0xf]
    %v161 = vld [vmem:[#allocation2 + $0x70] sm:$0xf]
    %v162 = vld [vmem:[#allocation2 + $0x74] sm:$0xf]
    %v163 = vld [vmem:[#allocation2 + $0x78] sm:$0xf]
    %v164 = vld [vmem:[#allocation2 + $0x7c] sm:$0xf]
    %v165 = vld [vmem:[%s4] sm:$0x1]
    %v167 = vperm.slane %v165, 0
    %v201 = vunpack.c.l.b16 %v133
    %v202 = vunpack.c.l.b16 %v134
    %v203 = vunpack.c.l.b16 %v135
    %v204 = vunpack.c.l.b16 %v136
    %v205 = vunpack.c.l.b16 %v137
    %v206 = vunpack.c.l.b16 %v138
    %v207 = vunpack.c.l.b16 %v139
    %v208 = vunpack.c.l.b16 %v140
    %v209 = vunpack.c.l.b16 %v141
    %v210 = vunpack.c.l.b16 %v142
    %v211 = vunpack.c.l.b16 %v143
    %v212 = vunpack.c.l.b16 %v144
    %v213 = vunpack.c.l.b16 %v145
    %v214 = vunpack.c.l.b16 %v146
    %v215 = vunpack.c.l.b16 %v147
    %v216 = vunpack.c.l.b16 %v148
    %v217 = vunpack.c.l.b16 %v149
    %v218 = vunpack.c.l.b16 %v150
    %v219 = vunpack.c.l.b16 %v151
    %v220 = vunpack.c.l.b16 %v152
    %v221 = vunpack.c.l.b16 %v153
    %v222 = vunpack.c.l.b16 %v154
    %v223 = vunpack.c.l.b16 %v155
    %v224 = vunpack.c.l.b16 %v156
    %v225 = vunpack.c.l.b16 %v157
    %v226 = vunpack.c.l.b16 %v158
    %v227 = vunpack.c.l.b16 %v159
    %v228 = vunpack.c.l.b16 %v160
    %v229 = vunpack.c.l.b16 %v161
    %v230 = vunpack.c.l.b16 %v162
    %v231 = vunpack.c.l.b16 %v163
    %v232 = vunpack.c.l.b16 %v164
    %v233 = vpack.c.b16 %v202, %v201
    %v234 = vpack.c.b16 %v204, %v203
    %v235 = vpack.c.b16 %v206, %v205
    %v236 = vpack.c.b16 %v208, %v207
    %v237 = vpack.c.b16 %v210, %v209
    %v238 = vpack.c.b16 %v212, %v211
    %v239 = vpack.c.b16 %v214, %v213
    %v240 = vpack.c.b16 %v216, %v215
    %v241 = vpack.c.b16 %v218, %v217
    %v242 = vpack.c.b16 %v220, %v219
    %v243 = vpack.c.b16 %v222, %v221
    %v244 = vpack.c.b16 %v224, %v223
    %v245 = vpack.c.b16 %v226, %v225
    %v246 = vpack.c.b16 %v228, %v227
    %v247 = vpack.c.b16 %v230, %v229
    %v248 = vpack.c.b16 %v232, %v231
    %265 = vmatpush.bf16.msra.mxu0 %v240
    %266 = vmatpush.bf16.msra.mxu0 %v239
    %267 = vmatpush.bf16.msra.mxu0 %v238
    %268 = vmatpush.bf16.msra.mxu0 %v237
    %269 = vmatpush.bf16.msra.mxu0 %v236
    %270 = vmatpush.bf16.msra.mxu0 %v235
    %271 = vmatpush.bf16.msra.mxu0 %v234
    %272 = vmatpush.bf16.msra.mxu0 %v233
    %273 = vmatmul.bf16.gmra.mxu0 %v131
    %v274 = vpop.f32.mrf.mxu0
    %v275 = vadd.f32 %v167, %v274
    %v276 = vpop.f32.mrf.mxu0
    %277 = vdwg.mxu0
    %278 = vmatpush.bf16.msra.mxu0 %v248
    %279 = vmatpush.bf16.msra.mxu0 %v247
    %280 = vmatpush.bf16.msra.mxu0 %v246
    %281 = vmatpush.bf16.msra.mxu0 %v245
    %282 = vmatpush.bf16.msra.mxu0 %v244
    %283 = vmatpush.bf16.msra.mxu0 %v243
    %284 = vmatpush.bf16.msra.mxu0 %v242
    %285 = vmatpush.bf16.msra.mxu0 %v241
    %286 = vmatmul.bf16.gmra.mxu0 %v132
    %v287 = vpop.f32.mrf.mxu0
    %v288 = vadd.f32 %v275, %v287
    %v289 = vpop.f32.mrf.mxu0
    %290 = vdwg.mxu0
    %v291 = vmax.f32 %v288, 0.0
    %v292 = vpack.c.bf16 %v291, %v291
    %v293 = vld [vmem:[#allocation4] sm:$0xf]
    %v294 = vld [vmem:[#allocation4 + $0x4] sm:$0xf]
    %v295 = vld [vmem:[#allocation4 + $0x8] sm:$0xf]
    %v296 = vld [vmem:[#allocation4 + $0xc] sm:$0xf]
    %v297 = vld [vmem:[#allocation4 + $0x10] sm:$0xf]
    %v298 = vld [vmem:[#allocation4 + $0x14] sm:$0xf]
    %v299 = vld [vmem:[#allocation4 + $0x18] sm:$0xf]
    %v300 = vld [vmem:[#allocation4 + $0x1c] sm:$0xf]
    %v301 = vld [vmem:[#allocation4 + $0x20] sm:$0xf]
    %v302 = vld [vmem:[#allocation4 + $0x24] sm:$0xf]
    %v303 = vld [vmem:[#allocation4 + $0x28] sm:$0xf]
    %v304 = vld [vmem:[#allocation4 + $0x2c] sm:$0xf]
    %v305 = vld [vmem:[#allocation4 + $0x30] sm:$0xf]
    %v306 = vld [vmem:[#allocation4 + $0x34] sm:$0xf]
    %v307 = vld [vmem:[#allocation4 + $0x38] sm:$0xf]
    %v308 = vld [vmem:[#allocation4 + $0x3c] sm:$0xf]
    %v325 = vunpack.c.l.b16 %v293
    %v326 = vunpack.c.l.b16 %v294
    %v327 = vunpack.c.l.b16 %v295
    %v328 = vunpack.c.l.b16 %v296
    %v329 = vunpack.c.l.b16 %v297
    %v330 = vunpack.c.l.b16 %v298
    %v331 = vunpack.c.l.b16 %v299
    %v332 = vunpack.c.l.b16 %v300
    %v333 = vunpack.c.l.b16 %v301
    %v334 = vunpack.c.l.b16 %v302
    %v335 = vunpack.c.l.b16 %v303
    %v336 = vunpack.c.l.b16 %v304
    %v337 = vunpack.c.l.b16 %v305
    %v338 = vunpack.c.l.b16 %v306
    %v339 = vunpack.c.l.b16 %v307
    %v340 = vunpack.c.l.b16 %v308
    %v341 = vpack.c.b16 %v326, %v325
    %v342 = vpack.c.b16 %v328, %v327
    %v343 = vpack.c.b16 %v330, %v329
    %v344 = vpack.c.b16 %v332, %v331
    %v345 = vpack.c.b16 %v334, %v333
    %v346 = vpack.c.b16 %v336, %v335
    %v347 = vpack.c.b16 %v338, %v337
    %v348 = vpack.c.b16 %v340, %v339
    %357 = vmatpush.bf16.msra.mxu0 %v348
    %358 = vmatpush.bf16.msra.mxu0 %v347
    %359 = vmatpush.bf16.msra.mxu0 %v346
    %360 = vmatpush.bf16.msra.mxu0 %v345
    %361 = vmatpush.bf16.msra.mxu0 %v344
    %362 = vmatpush.bf16.msra.mxu0 %v343
    %363 = vmatpush.bf16.msra.mxu0 %v342
    %364 = vmatpush.bf16.msra.mxu0 %v341
    %365 = vmatmul.bf16.gmra.mxu0 %v292
    %v366 = vpop.f32.mrf.mxu0
    %v367 = vadd.f32 0.0, %v366
    %v368 = vpop.f32.mrf.mxu0
    %369 = vdwg.mxu0
    %v370 = vld [vmem:[%s6] sm:$0x1]
    %v372 = vperm.slane %v370, 0
    %v374 = vadd.f32 %v367, %v372
    %vm375 = vcmask 15360
    %376 = vst.msk [vmem:[%s7] sm:$0xff] %vm375, %v374
    // Predicated region
    $region38: #{qnetwork_forward.1} parent=1 // pred_check
      _
    $region39: #{qnetwork_forward.1} parent=1 // pred_check_branch
      %378 = sbr.rel (0) target = $region41
    $region40: #{qnetwork_forward.1} parent=1 // pred_region
      _
    $region41: #{qnetwork_forward.1} parent=1 // pred_fallthru
      _
    // Predicated region
    $region42: #{qnetwork_forward.1} parent=1 // pred_check
      _
    $region43: #{qnetwork_forward.1} parent=1 // pred_check_branch
      %380 = sbr.rel (0) target = $region45
    $region44: #{qnetwork_forward.1} parent=1 // pred_region
      _
    $region45: #{qnetwork_forward.1} parent=1 // pred_fallthru
      _
    %381 = vsyncpa [#allocation3], 1
    %382 = vsyncpa [#allocation5], 1

</llo_original>
